<compile_context>
chip_gen: v5e
topology: v5e:2x2
jax: 0.10.0
libtpu: 0.0.40
codegen_flags: <defaults>
</compile_context>

<pallas_src>
import jax
import jax.numpy as jnp
from jax.experimental import pallas as pl
from jax.experimental.pallas import tpu as pltpu


def _lovasz_kernel(gts_ref, err_ref, gt_ref, out_ref, carry_ref, tri_ref):
    # gts_ref  : (B, 1) total positive pixels per image (sort-invariant)
    # err_ref  : (B, T) tile of hinge errors, sorted descending per image
    # gt_ref   : (B, T) tile of binary labels permuted by the same sort
    # out_ref  : (B, 1) per-image loss accumulator (resident across grid)
    # carry_ref: (B, 1) running cumsum carry from previous tiles (VMEM scratch)
    # tri_ref  : (T, T) upper-triangular ones, built once at step 0 (VMEM scratch)
    t = pl.program_id(0)
    T = gt_ref.shape[-1]

    @pl.when(t == 0)
    def _init():
        out_ref[...] = jnp.zeros_like(out_ref)
        carry_ref[...] = jnp.zeros_like(carry_ref)
        row = jax.lax.broadcasted_iota(jnp.int32, (T, T), 0)
        col = jax.lax.broadcasted_iota(jnp.int32, (T, T), 1)
        tri_ref[...] = (row <= col).astype(jnp.float32)  # tri[j, i] = 1 iff j <= i

    gt = gt_ref[...]                                     # (B, T)
    err = err_ref[...]                                   # (B, T)
    gts = gts_ref[...]                                   # (B, 1)

    # Within-tile inclusive cumsum on the MXU.  All values are small integers,
    # exact in f32 while H*W < 2^24.
    carry = carry_ref[...]
    csum = jnp.dot(gt, tri_ref[...], preferred_element_type=jnp.float32) + carry
    carry_ref[...] = carry + jnp.sum(gt, axis=-1, keepdims=True)

    # Global pixel index of each element in this tile.
    gidx = jax.lax.broadcasted_iota(jnp.int32, gt.shape, 1) + t * T
    gidx_f = gidx.astype(jnp.float32)

    inter = gts - csum                                   # intersection[i]
    union = gts + (gidx_f + 1.0) - csum                  # union[i]  (always >= 1)
    prev_csum = csum - gt
    prev_inter = gts - prev_csum                         # intersection[i-1]
    prev_union = gts + gidx_f - prev_csum                # union[i-1] (>= 1 for i > 0)

    # grad[i] = jaccard[i] - jaccard[i-1] for i > 0, grad[0] = jaccard[0],
    # folded into a single division.  The i == 0 mask keeps prev_union == gts == 0
    # (empty foreground) from ever hitting a 0/0.
    is_first = gidx == 0
    prev_union_s = jnp.where(is_first, 1.0, prev_union)
    num = jnp.where(is_first,
                    union - inter,
                    prev_inter * union - inter * prev_union_s)
    grad = num / (union * prev_union_s)

    # loss_b += dot(relu(errors_sorted_tile), grad_tile)
    out_ref[...] += jnp.sum(jnp.maximum(err, 0.0) * grad, axis=-1, keepdims=True)


def _pick_tile(n_pad):
    # Largest lane-aligned tile (<= 1024) dividing the padded pixel count.
    # n_pad is always a multiple of 128, so 128 always matches.
    for cand in (1024, 512, 256, 128):
        if n_pad % cand == 0:
            return cand
    return n_pad


def lovasz_hinge_loss(logits, targets):
    """Pallas implementation of LovaszHingeLoss.forward (per_image=True)."""
    B, C, H, W = logits.shape
    assert C == 1
    N = H * W
    logits = logits.reshape(B, N).astype(jnp.float32)
    labels = targets.reshape(B, N).astype(jnp.float32)

    signs = 2.0 * labels - 1.0
    errors = 1.0 - logits * signs

    # Total positives per image (permutation-invariant, so computed pre-sort,
    # pre-pad; padded labels are zero anyway).
    gts = jnp.sum(labels, axis=-1, keepdims=True)

    # Pad the pixel axis to a lane-aligned length.  Padded pixels get a huge
    # negative error (sorts strictly to the end, relu -> 0) and a zero label,
    # so they never change the cumsums or grads of real pixels.
    N_pad = ((N + 127) // 128) * 128
    if N_pad != N:
        pad = N_pad - N
        errors = jnp.pad(errors, ((0, 0), (0, pad)),
                         constant_values=jnp.finfo(jnp.float32).min / 2)
        labels = jnp.pad(labels, ((0, 0), (0, pad)))

    # Single key/value sort pass: descending errors with co-sorted labels.
    neg_sorted, gt_sorted = jax.lax.sort((-errors, labels), dimension=-1, num_keys=1)
    errors_sorted = -neg_sorted

    T = _pick_tile(N_pad)
    n_tiles = N_pad // T

    per_image = pl.pallas_call(
        _lovasz_kernel,
        out_shape=jax.ShapeDtypeStruct((B, 1), jnp.float32),
        grid=(n_tiles,),
        in_specs=[
            pl.BlockSpec((B, 1), lambda t: (0, 0)),
            pl.BlockSpec((B, T), lambda t: (0, t)),
            pl.BlockSpec((B, T), lambda t: (0, t)),
        ],
        out_specs=pl.BlockSpec((B, 1), lambda t: (0, 0)),
        scratch_shapes=[
            pltpu.VMEM((B, 1), jnp.float32),   # running cumsum carry
            pltpu.VMEM((T, T), jnp.float32),   # in-kernel triangular matrix
        ],
        compiler_params=pltpu.CompilerParams(
            dimension_semantics=("arbitrary",)),
    )(gts, errors_sorted, gt_sorted)

    return jnp.mean(per_image)


def lovasz_hinge_loss_ref(logits, targets):
    """Pure-JAX reference matching the PyTorch lovasz_hinge(per_image=True)."""
    B, C, H, W = logits.shape
    losses = []
    for b in range(B):
        log = logits[b].reshape(-1).astype(jnp.float32)
        lab = targets[b].reshape(-1).astype(jnp.float32)
        signs = 2.0 * lab - 1.0
        errors = 1.0 - log * signs
        order = jnp.argsort(-errors)
        errors_sorted = errors[order]
        gt_sorted = lab[order]
        gts = gt_sorted.sum()
        intersection = gts - jnp.cumsum(gt_sorted)
        union = gts + jnp.cumsum(1.0 - gt_sorted)
        jaccard = 1.0 - intersection / union
        grad = jnp.concatenate([jaccard[:1], jaccard[1:] - jaccard[:-1]])
        losses.append(jnp.sum(jnp.maximum(errors_sorted, 0.0) * grad))
    return jnp.mean(jnp.stack(losses))


if __name__ == "__main__":
    key = jax.random.PRNGKey(0)
    k1, k2 = jax.random.split(key)
    B, C, H, W = 2, 1, 16, 16
    logits = jax.random.normal(k1, (B, C, H, W), dtype=jnp.float32)
    targets = (jax.random.uniform(k2, (B, C, H, W)) > 0.5).astype(jnp.float32)

    loss = lovasz_hinge_loss(logits, targets)
    loss = jax.block_until_ready(loss)

    ref = lovasz_hinge_loss_ref(logits, targets)
    assert jnp.allclose(loss, ref, rtol=1e-5, atol=1e-5), (loss, ref)
    print("KERNEL_OK")
</pallas_src>

<mosaic_0001>
module attributes {stable_mosaic.version = 11 : i64} {
  func.func @_lovasz_kernel(%arg0: i32, %arg1: memref<2x1xf32, #tpu.memory_space<vmem>>, %arg2: memref<2x256xf32, #tpu.memory_space<vmem>>, %arg3: memref<2x256xf32, #tpu.memory_space<vmem>>, %arg4: memref<2x1xf32, #tpu.memory_space<vmem>>, %arg5: memref<2x1xf32, #tpu.memory_space<vmem>>, %arg6: memref<256x256xf32, #tpu.memory_space<vmem>>) attributes {dimension_semantics = [#tpu.dimension_semantics<arbitrary>], iteration_bounds = array<i64: 1>, scalar_prefetch = 0 : i64, scratch_operands = 2 : i64, tpu.core_type = #tpu.core_type<tc>, window_params = [{pipeline_mode = #tpu.pipeline_mode<synchronous>, transform_indices = @transform_0, window_bounds = array<i64: 2, 1>}, {transform_indices = @transform_1, window_bounds = array<i64: 2, 256>}, {transform_indices = @transform_2, window_bounds = array<i64: 2, 256>}, {pipeline_mode = #tpu.pipeline_mode<synchronous>, transform_indices = @transform_3, window_bounds = array<i64: 2, 1>}]} {
    %c0_i32 = arith.constant 0 : i32
    %0 = arith.cmpi eq, %arg0, %c0_i32 : i32
    %1 = arith.extui %0 : i1 to i32
    %c0_i32_0 = arith.constant 0 : i32
    %2 = arith.cmpi ne, %1, %c0_i32_0 : i32
    scf.if %2 {
      %cst_22 = arith.constant 0.000000e+00 : f32
      %52 = vector.broadcast %cst_22 : f32 to vector<2x1xf32>
      %c0_23 = arith.constant 0 : index
      %c0_24 = arith.constant 0 : index
      %53 = vector.load %arg4[%c0_23, %c0_24] : memref<2x1xf32, #tpu.memory_space<vmem>>, vector<2x1xf32>
      tpu.vector_store %arg4[%c0_23, %c0_24], %52 {strides = array<i32>} : memref<2x1xf32, #tpu.memory_space<vmem>>, vector<2x1xf32>,
      %cst_25 = arith.constant 0.000000e+00 : f32
      %54 = vector.broadcast %cst_25 : f32 to vector<2x1xf32>
      %c0_26 = arith.constant 0 : index
      %c0_27 = arith.constant 0 : index
      %55 = vector.load %arg5[%c0_26, %c0_27] : memref<2x1xf32, #tpu.memory_space<vmem>>, vector<2x1xf32>
      tpu.vector_store %arg5[%c0_26, %c0_27], %54 {strides = array<i32>} : memref<2x1xf32, #tpu.memory_space<vmem>>, vector<2x1xf32>,
      %56 = tpu.iota {dimensions = array<i32: 0>} : vector<256x256xi32>
      %57 = tpu.iota {dimensions = array<i32: 1>} : vector<256x256xi32>
      %58 = arith.cmpi sle, %56, %57 : vector<256x256xi32>
      %59 = arith.extui %58 : vector<256x256xi1> to vector<256x256xi32>
      %60 = arith.sitofp %59 : vector<256x256xi32> to vector<256x256xf32>
      %c0_28 = arith.constant 0 : index
      %c0_29 = arith.constant 0 : index
      %61 = vector.load %arg6[%c0_28, %c0_29] : memref<256x256xf32, #tpu.memory_space<vmem>>, vector<256x256xf32>
      tpu.vector_store %arg6[%c0_28, %c0_29], %60 {strides = array<i32>} : memref<256x256xf32, #tpu.memory_space<vmem>>, vector<256x256xf32>,
    } else {
    }
    %c0 = arith.constant 0 : index
    %c0_1 = arith.constant 0 : index
    %3 = vector.load %arg3[%c0, %c0_1] : memref<2x256xf32, #tpu.memory_space<vmem>>, vector<2x256xf32>
    %c0_2 = arith.constant 0 : index
    %c0_3 = arith.constant 0 : index
    %4 = vector.load %arg2[%c0_2, %c0_3] : memref<2x256xf32, #tpu.memory_space<vmem>>, vector<2x256xf32>
    %c0_4 = arith.constant 0 : index
    %c0_5 = arith.constant 0 : index
    %5 = vector.load %arg1[%c0_4, %c0_5] : memref<2x1xf32, #tpu.memory_space<vmem>>, vector<2x1xf32>
    %c0_6 = arith.constant 0 : index
    %c0_7 = arith.constant 0 : index
    %6 = vector.load %arg5[%c0_6, %c0_7] : memref<2x1xf32, #tpu.memory_space<vmem>>, vector<2x1xf32>
    %c0_8 = arith.constant 0 : index
    %c0_9 = arith.constant 0 : index
    %7 = vector.load %arg6[%c0_8, %c0_9] : memref<256x256xf32, #tpu.memory_space<vmem>>, vector<256x256xf32>
    %cst = arith.constant dense<0.000000e+00> : vector<2x256xf32>
    %8 = tpu.matmul %3, %7, %cst {dimension_numbers = #tpu.dot_dimension_numbers<[1], [0], [0], [1], [0, 0, 1, 1], [], []>} : vector<2x256xf32>, vector<256x256xf32>, vector<2x256xf32> -> vector<2x256xf32>
    %9 = vector.broadcast %6 : vector<2x1xf32> to vector<2x256xf32>
    %10 = arith.addf %8, %9 : vector<2x256xf32>
    %cst_10 = arith.constant dense<0.000000e+00> : vector<2xf32>
    %11 = vector.multi_reduction <add>, %3, %cst_10 [1] : vector<2x256xf32> to vector<2xf32>
    %12 = vector.shape_cast %11 : vector<2xf32> to vector<2x1xf32>
    %13 = arith.addf %6, %12 : vector<2x1xf32>
    %c0_11 = arith.constant 0 : index
    %c0_12 = arith.constant 0 : index
    %14 = vector.load %arg5[%c0_11, %c0_12] : memref<2x1xf32, #tpu.memory_space<vmem>>, vector<2x1xf32>
    tpu.vector_store %arg5[%c0_11, %c0_12], %13 {strides = array<i32>} : memref<2x1xf32, #tpu.memory_space<vmem>>, vector<2x1xf32>,
    %15 = tpu.iota {dimensions = array<i32: 1>} : vector<2x256xi32>
    %c256_i32 = arith.constant 256 : i32
    %16 = arith.muli %arg0, %c256_i32 : i32
    %17 = vector.broadcast %16 : i32 to vector<2x256xi32>
    %18 = arith.addi %15, %17 : vector<2x256xi32>
    %19 = arith.sitofp %18 : vector<2x256xi32> to vector<2x256xf32>
    %20 = vector.broadcast %5 : vector<2x1xf32> to vector<2x256xf32>
    %21 = arith.subf %20, %10 : vector<2x256xf32>
    %cst_13 = arith.constant 1.000000e+00 : f32
    %22 = vector.broadcast %cst_13 : f32 to vector<2x256xf32>
    %23 = arith.addf %19, %22 : vector<2x256xf32>
    %24 = vector.broadcast %5 : vector<2x1xf32> to vector<2x256xf32>
    %25 = arith.addf %24, %23 : vector<2x256xf32>
    %26 = arith.subf %25, %10 : vector<2x256xf32>
    %27 = arith.subf %10, %3 : vector<2x256xf32>
    %28 = vector.broadcast %5 : vector<2x1xf32> to vector<2x256xf32>
    %29 = arith.subf %28, %27 : vector<2x256xf32>
    %30 = vector.broadcast %5 : vector<2x1xf32> to vector<2x256xf32>
    %31 = arith.addf %30, %19 : vector<2x256xf32>
    %32 = arith.subf %31, %27 : vector<2x256xf32>
    %c0_i32_14 = arith.constant 0 : i32
    %33 = vector.broadcast %c0_i32_14 : i32 to vector<2x256xi32>
    %34 = arith.cmpi eq, %18, %33 : vector<2x256xi32>
    %cst_15 = arith.constant 1.000000e+00 : f32
    %35 = vector.broadcast %cst_15 : f32 to vector<2x256xf32>
    %36 = arith.select %34, %35, %32 : vector<2x256xi1>, vector<2x256xf32>
    %37 = arith.subf %26, %21 : vector<2x256xf32>
    %38 = arith.mulf %29, %26 : vector<2x256xf32>
    %39 = arith.mulf %21, %36 : vector<2x256xf32>
    %40 = arith.subf %38, %39 : vector<2x256xf32>
    %41 = arith.select %34, %37, %40 : vector<2x256xi1>, vector<2x256xf32>
    %42 = arith.mulf %26, %36 : vector<2x256xf32>
    %43 = arith.divf %41, %42 : vector<2x256xf32>
    %c0_16 = arith.constant 0 : index
    %c0_17 = arith.constant 0 : index
    %44 = vector.load %arg4[%c0_16, %c0_17] : memref<2x1xf32, #tpu.memory_space<vmem>>, vector<2x1xf32>
    %cst_18 = arith.constant 0.000000e+00 : f32
    %45 = vector.broadcast %cst_18 : f32 to vector<2x256xf32>
    %46 = arith.maximumf %4, %45 : vector<2x256xf32>
    %47 = arith.mulf %46, %43 : vector<2x256xf32>
    %cst_19 = arith.constant dense<0.000000e+00> : vector<2xf32>
    %48 = vector.multi_reduction <add>, %47, %cst_19 [1] : vector<2x256xf32> to vector<2xf32>
    %49 = vector.shape_cast %48 : vector<2xf32> to vector<2x1xf32>
    %50 = arith.addf %44, %49 : vector<2x1xf32>
    %c0_20 = arith.constant 0 : index
    %c0_21 = arith.constant 0 : index
    %51 = vector.load %arg4[%c0_20, %c0_21] : memref<2x1xf32, #tpu.memory_space<vmem>>, vector<2x1xf32>
    tpu.vector_store %arg4[%c0_20, %c0_21], %50 {strides = array<i32>} : memref<2x1xf32, #tpu.memory_space<vmem>>, vector<2x1xf32>,
    return
  }
  func.func @transform_0(%arg0: i32) -> (i32, i32) {
    %c0_i32 = arith.constant 0 : i32
    %c0_i32_0 = arith.constant 0 : i32
    %c0_i32_1 = arith.constant 0 : i32
    return %c0_i32, %c0_i32_0 : i32, i32
  }
  func.func @transform_1(%arg0: i32) -> (i32, i32) {
    %c0_i32 = arith.constant 0 : i32
    %c0_i32_0 = arith.constant 0 : i32
    return %c0_i32, %arg0 : i32, i32
  }
  func.func @transform_2(%arg0: i32) -> (i32, i32) {
    %c0_i32 = arith.constant 0 : i32
    %c0_i32_0 = arith.constant 0 : i32
    return %c0_i32, %arg0 : i32, i32
  }
  func.func @transform_3(%arg0: i32) -> (i32, i32) {
    %c0_i32 = arith.constant 0 : i32
    %c0_i32_0 = arith.constant 0 : i32
    %c0_i32_1 = arith.constant 0 : i32
    return %c0_i32, %c0_i32_0 : i32, i32
  }
}

</mosaic_0001>

<llo_original>
// kernel: tpu_custom_call.1
$region0: #{tpu_custom_call.1}
  #allocation0 [shape = 'u32[]', space=smem, size = 0x4, offset = 0x4, fixed_abs, tag = 'smem constant byte address 0x4 - core index']
  #allocation1 [shape = 'u32[72,128]{1,0:T(1,128)}', space=vmem, size = 0x9000, scoped, tag = 'internal scratch']
  #allocation2 [shape = 'f32[2,1]{1,0:T(2,128)}', space=vmem, size = 0x400, scoped, tag = 'scratch operand']
  #allocation3 [shape = 'f32[256,256]{1,0:T(8,128)}', space=vmem, size = 0x40000, scoped, tag = 'scratch operand']
  %s0 = inlined_call_operand.vmem [shape: f32[2,1], index: 0, kind: input, shape index: {}]
  %s1 = inlined_call_operand.hbm [shape: f32[2,256], index: 1, kind: input, shape index: {}]
  %s2 = inlined_call_operand.vmem [shape: f32[2,256], index: 2, kind: input, shape index: {}]
  %s3 = inlined_call_operand.vmem [shape: f32[2,1], index: 3, kind: output, shape index: {}]
  %s4 = sld [smem:[#allocation0]]
  $region30: #{tpu_custom_call.1} parent=0
    _
  %s6 = ssub.s32 1, %s4
  %s7 = scalar_select 0, %s6, %s4
  $region1: #{tpu_custom_call.1} parent=0
    #allocation4 [shape = 'u8[2048]{0}', space=vmem, size = 0x800, scoped, tag = 'input window, operand 1, single buffered']
    #allocation5 [shape = 's32[1]{0}', space=sflag, size = 0x4, scoped, tag = 'scoped memory for tpu_custom_call.1']
    %8 = vsyncpa [#allocation5], 0
    // Predicated region
    $region2: #{tpu_custom_call.1} parent=1 // pred_check
      _
    $region3: #{tpu_custom_call.1} parent=1 // pred_check_branch
      %10 = sbr.rel (0) target = $region5
    $region4: #{tpu_custom_call.1} parent=1 // pred_region
      _
    $region5: #{tpu_custom_call.1} parent=1 // pred_fallthru
      _
    // Predicated region
    $region6: #{tpu_custom_call.1} parent=1 // pred_check
      _
    $region7: #{tpu_custom_call.1} parent=1 // pred_check_branch
      %12 = sbr.rel (0) target = $region9
    $region8: #{tpu_custom_call.1} parent=1 // pred_region
      %14 = vsyncadd [#allocation5], 0
      %s16 = sshll.u32 %s1, 4
      %s17 = int_to_ptr.hbm [resolvable:$true] %s16
      %s18 = sshll.u32 [#allocation4], 4
      %s19 = int_to_ptr.vmem [resolvable:$true] %s18
      %21 = dma.hbm_to_vmem [thread:$0]  %s17, 64, %s19, [#allocation5]
    $region9: #{tpu_custom_call.1} parent=1 // pred_fallthru
      _
    // Predicated region
    $region10: #{tpu_custom_call.1} parent=1 // pred_check
      _
    $region11: #{tpu_custom_call.1} parent=1 // pred_check_branch
      %23 = sbr.rel (0) target = $region13
    $region12: #{tpu_custom_call.1} parent=1 // pred_region
      _
    $region13: #{tpu_custom_call.1} parent=1 // pred_fallthru
      _
    // Predicated region
    $region14: #{tpu_custom_call.1} parent=1 // pred_check
      _
    $region15: #{tpu_custom_call.1} parent=1 // pred_check_branch
      %25 = sbr.rel (0) target = $region17
    $region16: #{tpu_custom_call.1} parent=1 // pred_region
      %27 = dma.done [#allocation5], 64
    $region17: #{tpu_custom_call.1} parent=1 // pred_fallthru
      _
    %p28 = scmp.eq.s32.totalorder 0, 0
    // Predicated region
    $region18: #{tpu_custom_call.1} parent=1 // pred_check
      %p29 = pneg %p28
    $region19: #{tpu_custom_call.1} parent=1 // pred_check_branch
      %31 = sbr.rel (%p29) target = $region21
    $region20: #{tpu_custom_call.1} parent=1 // pred_region
      %vm32 = vcmask 1024
      %33 = vst.msk [vmem:[%s3] sm:$0x3] %vm32, 0.0
      %34 = vst.msk [vmem:[#allocation2] sm:$0x3] %vm32, 0.0
      %v35 = vlaneseq
      %v36 = vshrl.u32 %v35, 7
      %v37 = vadd.s32 %v36, 8
      %v38 = vadd.s32 %v36, 16
      %v39 = vadd.s32 %v36, 24
      %v40 = vadd.s32 %v36, 32
      %v41 = vadd.s32 %v36, 40
      %v42 = vadd.s32 %v36, 48
      %v43 = vadd.s32 %v36, 56
      %v44 = vadd.s32 %v36, 64
      %v45 = vadd.s32 %v36, 72
      %v46 = vadd.s32 %v36, 80
      %v47 = vadd.s32 %v36, 88
      %v48 = vadd.s32 %v36, 96
      %v49 = vadd.s32 %v36, 104
      %v50 = vadd.s32 %v36, 112
      %v51 = vadd.s32 %v36, 120
      %v52 = vadd.s32 %v36, 128
      %v53 = vadd.s32 %v36, 136
      %v54 = vadd.s32 %v36, 144
      %v55 = vadd.s32 %v36, 152
      %v56 = vadd.s32 %v36, 160
      %v57 = vadd.s32 %v36, 168
      %v58 = vadd.s32 %v36, 176
      %v59 = vadd.s32 %v36, 184
      %v60 = vadd.s32 %v36, 192
      %v61 = vadd.s32 %v36, 200
      %v62 = vadd.s32 %v36, 208
      %v63 = vadd.s32 %v36, 216
      %v64 = vadd.s32 %v36, 224
      %v65 = vadd.s32 %v36, 232
      %v66 = vadd.s32 %v36, 240
      %v67 = vadd.s32 %v36, 248
      %v68 = vlaneseq
      %v69 = vand.u32 %v68, 127
      %v70 = vadd.s32 %v69, 128
      %vm71 = vcmp.le.s32.totalorder %v36, %v69
      %vm72 = vcmp.le.s32.totalorder %v36, %v70
      %vm73 = vcmp.le.s32.totalorder %v37, %v69
      %vm74 = vcmp.le.s32.totalorder %v37, %v70
      %vm75 = vcmp.le.s32.totalorder %v38, %v69
      %vm76 = vcmp.le.s32.totalorder %v38, %v70
      %vm77 = vcmp.le.s32.totalorder %v39, %v69
      %vm78 = vcmp.le.s32.totalorder %v39, %v70
      %vm79 = vcmp.le.s32.totalorder %v40, %v69
      %vm80 = vcmp.le.s32.totalorder %v40, %v70
      %vm81 = vcmp.le.s32.totalorder %v41, %v69
      %vm82 = vcmp.le.s32.totalorder %v41, %v70
      %vm83 = vcmp.le.s32.totalorder %v42, %v69
      %vm84 = vcmp.le.s32.totalorder %v42, %v70
      %vm85 = vcmp.le.s32.totalorder %v43, %v69
      %vm86 = vcmp.le.s32.totalorder %v43, %v70
      %vm87 = vcmp.le.s32.totalorder %v44, %v69
      %vm88 = vcmp.le.s32.totalorder %v44, %v70
      %vm89 = vcmp.le.s32.totalorder %v45, %v69
      %vm90 = vcmp.le.s32.totalorder %v45, %v70
      %vm91 = vcmp.le.s32.totalorder %v46, %v69
      %vm92 = vcmp.le.s32.totalorder %v46, %v70
      %vm93 = vcmp.le.s32.totalorder %v47, %v69
      %vm94 = vcmp.le.s32.totalorder %v47, %v70
      %vm95 = vcmp.le.s32.totalorder %v48, %v69
      %vm96 = vcmp.le.s32.totalorder %v48, %v70
      %vm97 = vcmp.le.s32.totalorder %v49, %v69
      %vm98 = vcmp.le.s32.totalorder %v49, %v70
      %vm99 = vcmp.le.s32.totalorder %v50, %v69
      %vm100 = vcmp.le.s32.totalorder %v50, %v70
      %vm101 = vcmp.le.s32.totalorder %v51, %v69
      %vm102 = vcmp.le.s32.totalorder %v51, %v70
      %vm103 = vcmp.le.s32.totalorder %v52, %v69
      %vm104 = vcmp.le.s32.totalorder %v52, %v70
      %vm105 = vcmp.le.s32.totalorder %v53, %v69
      %vm106 = vcmp.le.s32.totalorder %v53, %v70
      %vm107 = vcmp.le.s32.totalorder %v54, %v69
      %vm108 = vcmp.le.s32.totalorder %v54, %v70
      %vm109 = vcmp.le.s32.totalorder %v55, %v69
      %vm110 = vcmp.le.s32.totalorder %v55, %v70
      %vm111 = vcmp.le.s32.totalorder %v56, %v69
      %vm112 = vcmp.le.s32.totalorder %v56, %v70
      %vm113 = vcmp.le.s32.totalorder %v57, %v69
      %vm114 = vcmp.le.s32.totalorder %v57, %v70
      %vm115 = vcmp.le.s32.totalorder %v58, %v69
      %vm116 = vcmp.le.s32.totalorder %v58, %v70
      %vm117 = vcmp.le.s32.totalorder %v59, %v69
      %vm118 = vcmp.le.s32.totalorder %v59, %v70
      %vm119 = vcmp.le.s32.totalorder %v60, %v69
      %vm120 = vcmp.le.s32.totalorder %v60, %v70
      %vm121 = vcmp.le.s32.totalorder %v61, %v69
      %vm122 = vcmp.le.s32.totalorder %v61, %v70
      %vm123 = vcmp.le.s32.totalorder %v62, %v69
      %vm124 = vcmp.le.s32.totalorder %v62, %v70
      %vm125 = vcmp.le.s32.totalorder %v63, %v69
      %vm126 = vcmp.le.s32.totalorder %v63, %v70
      %vm127 = vcmp.le.s32.totalorder %v64, %v69
      %vm128 = vcmp.le.s32.totalorder %v64, %v70
      %vm129 = vcmp.le.s32.totalorder %v65, %v69
      %vm130 = vcmp.le.s32.totalorder %v65, %v70
      %vm131 = vcmp.le.s32.totalorder %v66, %v69
      %vm132 = vcmp.le.s32.totalorder %v66, %v70
      %vm133 = vcmp.le.s32.totalorder %v67, %v69
      %vm134 = vcmp.le.s32.totalorder %v67, %v70
      %v135 = vsel %vm71, 1, 0
      %v136 = vsel %vm72, 1, 0
      %v137 = vsel %vm73, 1, 0
      %v138 = vsel %vm74, 1, 0
      %v139 = vsel %vm75, 1, 0
      %v140 = vsel %vm76, 1, 0
      %v141 = vsel %vm77, 1, 0
      %v142 = vsel %vm78, 1, 0
      %v143 = vsel %vm79, 1, 0
      %v144 = vsel %vm80, 1, 0
      %v145 = vsel %vm81, 1, 0
      %v146 = vsel %vm82, 1, 0
      %v147 = vsel %vm83, 1, 0
      %v148 = vsel %vm84, 1, 0
      %v149 = vsel %vm85, 1, 0
      %v150 = vsel %vm86, 1, 0
      %v151 = vsel %vm87, 1, 0
      %v152 = vsel %vm88, 1, 0
      %v153 = vsel %vm89, 1, 0
      %v154 = vsel %vm90, 1, 0
      %v155 = vsel %vm91, 1, 0
      %v156 = vsel %vm92, 1, 0
      %v157 = vsel %vm93, 1, 0
      %v158 = vsel %vm94, 1, 0
      %v159 = vsel %vm95, 1, 0
      %v160 = vsel %vm96, 1, 0
      %v161 = vsel %vm97, 1, 0
      %v162 = vsel %vm98, 1, 0
      %v163 = vsel %vm99, 1, 0
      %v164 = vsel %vm100, 1, 0
      %v165 = vsel %vm101, 1, 0
      %v166 = vsel %vm102, 1, 0
      %v167 = vsel %vm103, 1, 0
      %v168 = vsel %vm104, 1, 0
      %v169 = vsel %vm105, 1, 0
      %v170 = vsel %vm106, 1, 0
      %v171 = vsel %vm107, 1, 0
      %v172 = vsel %vm108, 1, 0
      %v173 = vsel %vm109, 1, 0
      %v174 = vsel %vm110, 1, 0
      %v175 = vsel %vm111, 1, 0
      %v176 = vsel %vm112, 1, 0
      %v177 = vsel %vm113, 1, 0
      %v178 = vsel %vm114, 1, 0
      %v179 = vsel %vm115, 1, 0
      %v180 = vsel %vm116, 1, 0
      %v181 = vsel %vm117, 1, 0
      %v182 = vsel %vm118, 1, 0
      %v183 = vsel %vm119, 1, 0
      %v184 = vsel %vm120, 1, 0
      %v185 = vsel %vm121, 1, 0
      %v186 = vsel %vm122, 1, 0
      %v187 = vsel %vm123, 1, 0
      %v188 = vsel %vm124, 1, 0
      %v189 = vsel %vm125, 1, 0
      %v190 = vsel %vm126, 1, 0
      %v191 = vsel %vm127, 1, 0
      %v192 = vsel %vm128, 1, 0
      %v193 = vsel %vm129, 1, 0
      %v194 = vsel %vm130, 1, 0
      %v195 = vsel %vm131, 1, 0
      %v196 = vsel %vm132, 1, 0
      %v197 = vsel %vm133, 1, 0
      %v198 = vsel %vm134, 1, 0
      %v199 = vcvt.s32.f32 %v135
      %v200 = vcvt.s32.f32 %v136
      %v201 = vcvt.s32.f32 %v137
      %v202 = vcvt.s32.f32 %v138
      %v203 = vcvt.s32.f32 %v139
      %v204 = vcvt.s32.f32 %v140
      %v205 = vcvt.s32.f32 %v141
      %v206 = vcvt.s32.f32 %v142
      %v207 = vcvt.s32.f32 %v143
      %v208 = vcvt.s32.f32 %v144
      %v209 = vcvt.s32.f32 %v145
      %v210 = vcvt.s32.f32 %v146
      %v211 = vcvt.s32.f32 %v147
      %v212 = vcvt.s32.f32 %v148
      %v213 = vcvt.s32.f32 %v149
      %v214 = vcvt.s32.f32 %v150
      %v215 = vcvt.s32.f32 %v151
      %v216 = vcvt.s32.f32 %v152
      %v217 = vcvt.s32.f32 %v153
      %v218 = vcvt.s32.f32 %v154
      %v219 = vcvt.s32.f32 %v155
      %v220 = vcvt.s32.f32 %v156
      %v221 = vcvt.s32.f32 %v157
      %v222 = vcvt.s32.f32 %v158
      %v223 = vcvt.s32.f32 %v159
      %v224 = vcvt.s32.f32 %v160
      %v225 = vcvt.s32.f32 %v161
      %v226 = vcvt.s32.f32 %v162
      %v227 = vcvt.s32.f32 %v163
      %v228 = vcvt.s32.f32 %v164
      %v229 = vcvt.s32.f32 %v165
      %v230 = vcvt.s32.f32 %v166
      %v231 = vcvt.s32.f32 %v167
      %v232 = vcvt.s32.f32 %v168
      %v233 = vcvt.s32.f32 %v169
      %v234 = vcvt.s32.f32 %v170
      %v235 = vcvt.s32.f32 %v171
      %v236 = vcvt.s32.f32 %v172
      %v237 = vcvt.s32.f32 %v173
      %v238 = vcvt.s32.f32 %v174
      %v239 = vcvt.s32.f32 %v175
      %v240 = vcvt.s32.f32 %v176
      %v241 = vcvt.s32.f32 %v177
      %v242 = vcvt.s32.f32 %v178
      %v243 = vcvt.s32.f32 %v179
      %v244 = vcvt.s32.f32 %v180
      %v245 = vcvt.s32.f32 %v181
      %v246 = vcvt.s32.f32 %v182
      %v247 = vcvt.s32.f32 %v183
      %v248 = vcvt.s32.f32 %v184
      %v249 = vcvt.s32.f32 %v185
      %v250 = vcvt.s32.f32 %v186
      %v251 = vcvt.s32.f32 %v187
      %v252 = vcvt.s32.f32 %v188
      %v253 = vcvt.s32.f32 %v189
      %v254 = vcvt.s32.f32 %v190
      %v255 = vcvt.s32.f32 %v191
      %v256 = vcvt.s32.f32 %v192
      %v257 = vcvt.s32.f32 %v193
      %v258 = vcvt.s32.f32 %v194
      %v259 = vcvt.s32.f32 %v195
      %v260 = vcvt.s32.f32 %v196
      %v261 = vcvt.s32.f32 %v197
      %v262 = vcvt.s32.f32 %v198
      %263 = vst [vmem:[#allocation3] sm:$0xff] %v199
      %264 = vst [vmem:[#allocation3 + $0x8] sm:$0xff] %v200
      %265 = vst [vmem:[#allocation3 + $0x10] sm:$0xff] %v201
      %266 = vst [vmem:[#allocation3 + $0x18] sm:$0xff] %v202
      %267 = vst [vmem:[#allocation3 + $0x20] sm:$0xff] %v203
      %268 = vst [vmem:[#allocation3 + $0x28] sm:$0xff] %v204
      %269 = vst [vmem:[#allocation3 + $0x30] sm:$0xff] %v205
      %270 = vst [vmem:[#allocation3 + $0x38] sm:$0xff] %v206
      %271 = vst [vmem:[#allocation3 + $0x40] sm:$0xff] %v207
      %272 = vst [vmem:[#allocation3 + $0x48] sm:$0xff] %v208
      %273 = vst [vmem:[#allocation3 + $0x50] sm:$0xff] %v209
      %274 = vst [vmem:[#allocation3 + $0x58] sm:$0xff] %v210
      %275 = vst [vmem:[#allocation3 + $0x60] sm:$0xff] %v211
      %276 = vst [vmem:[#allocation3 + $0x68] sm:$0xff] %v212
      %277 = vst [vmem:[#allocation3 + $0x70] sm:$0xff] %v213
      %278 = vst [vmem:[#allocation3 + $0x78] sm:$0xff] %v214
      %279 = vst [vmem:[#allocation3 + $0x80] sm:$0xff] %v215
      %280 = vst [vmem:[#allocation3 + $0x88] sm:$0xff] %v216
      %281 = vst [vmem:[#allocation3 + $0x90] sm:$0xff] %v217
      %282 = vst [vmem:[#allocation3 + $0x98] sm:$0xff] %v218
      %283 = vst [vmem:[#allocation3 + $0xa0] sm:$0xff] %v219
      %284 = vst [vmem:[#allocation3 + $0xa8] sm:$0xff] %v220
      %285 = vst [vmem:[#allocation3 + $0xb0] sm:$0xff] %v221
      %286 = vst [vmem:[#allocation3 + $0xb8] sm:$0xff] %v222
      %287 = vst [vmem:[#allocation3 + $0xc0] sm:$0xff] %v223
      %288 = vst [vmem:[#allocation3 + $0xc8] sm:$0xff] %v224
      %289 = vst [vmem:[#allocation3 + $0xd0] sm:$0xff] %v225
      %290 = vst [vmem:[#allocation3 + $0xd8] sm:$0xff] %v226
      %291 = vst [vmem:[#allocation3 + $0xe0] sm:$0xff] %v227
      %292 = vst [vmem:[#allocation3 + $0xe8] sm:$0xff] %v228
      %293 = vst [vmem:[#allocation3 + $0xf0] sm:$0xff] %v229
      %294 = vst [vmem:[#allocation3 + $0xf8] sm:$0xff] %v230
      %295 = vst [vmem:[#allocation3 + $0x100] sm:$0xff] %v231
      %296 = vst [vmem:[#allocation3 + $0x108] sm:$0xff] %v232
      %297 = vst [vmem:[#allocation3 + $0x110] sm:$0xff] %v233
      %298 = vst [vmem:[#allocation3 + $0x118] sm:$0xff] %v234
      %299 = vst [vmem:[#allocation3 + $0x120] sm:$0xff] %v235
      %300 = vst [vmem:[#allocation3 + $0x128] sm:$0xff] %v236
      %301 = vst [vmem:[#allocation3 + $0x130] sm:$0xff] %v237
      %302 = vst [vmem:[#allocation3 + $0x138] sm:$0xff] %v238
      %303 = vst [vmem:[#allocation3 + $0x140] sm:$0xff] %v239
      %304 = vst [vmem:[#allocation3 + $0x148] sm:$0xff] %v240
      %305 = vst [vmem:[#allocation3 + $0x150] sm:$0xff] %v241
      %306 = vst [vmem:[#allocation3 + $0x158] sm:$0xff] %v242
      %307 = vst [vmem:[#allocation3 + $0x160] sm:$0xff] %v243
      %308 = vst [vmem:[#allocation3 + $0x168] sm:$0xff] %v244
      %309 = vst [vmem:[#allocation3 + $0x170] sm:$0xff] %v245
      %310 = vst [vmem:[#allocation3 + $0x178] sm:$0xff] %v246
      %311 = vst [vmem:[#allocation3 + $0x180] sm:$0xff] %v247
      %312 = vst [vmem:[#allocation3 + $0x188] sm:$0xff] %v248
      %313 = vst [vmem:[#allocation3 + $0x190] sm:$0xff] %v249
      %314 = vst [vmem:[#allocation3 + $0x198] sm:$0xff] %v250
      %315 = vst [vmem:[#allocation3 + $0x1a0] sm:$0xff] %v251
      %316 = vst [vmem:[#allocation3 + $0x1a8] sm:$0xff] %v252
      %317 = vst [vmem:[#allocation3 + $0x1b0] sm:$0xff] %v253
      %318 = vst [vmem:[#allocation3 + $0x1b8] sm:$0xff] %v254
      %319 = vst [vmem:[#allocation3 + $0x1c0] sm:$0xff] %v255
      %320 = vst [vmem:[#allocation3 + $0x1c8] sm:$0xff] %v256
      %321 = vst [vmem:[#allocation3 + $0x1d0] sm:$0xff] %v257
      %322 = vst [vmem:[#allocation3 + $0x1d8] sm:$0xff] %v258
      %323 = vst [vmem:[#allocation3 + $0x1e0] sm:$0xff] %v259
      %324 = vst [vmem:[#allocation3 + $0x1e8] sm:$0xff] %v260
      %325 = vst [vmem:[#allocation3 + $0x1f0] sm:$0xff] %v261
      %326 = vst [vmem:[#allocation3 + $0x1f8] sm:$0xff] %v262
    $region21: #{tpu_custom_call.1} parent=1 // pred_fallthru
      _
    %v327 = vld [vmem:[%s2] sm:$0xf]
    %v328 = vld [vmem:[#allocation4] sm:$0xf]
    %v329 = vld [vmem:[%s0] sm:$0x3]
    %v330 = vld [vmem:[#allocation2] sm:$0x3]
    %v331 = vld [vmem:[#allocation3] sm:$0xff]
    %v332 = vld [vmem:[#allocation3 + $0x8] sm:$0xff]
    %v333 = vld [vmem:[#allocation3 + $0x10] sm:$0xff]
    %v334 = vld [vmem:[#allocation3 + $0x18] sm:$0xff]
    %v335 = vld [vmem:[#allocation3 + $0x20] sm:$0xff]
    %v336 = vld [vmem:[#allocation3 + $0x28] sm:$0xff]
    %v337 = vld [vmem:[#allocation3 + $0x30] sm:$0xff]
    %v338 = vld [vmem:[#allocation3 + $0x38] sm:$0xff]
    %v339 = vld [vmem:[#allocation3 + $0x40] sm:$0xff]
    %v340 = vld [vmem:[#allocation3 + $0x48] sm:$0xff]
    %v341 = vld [vmem:[#allocation3 + $0x50] sm:$0xff]
    %v342 = vld [vmem:[#allocation3 + $0x58] sm:$0xff]
    %v343 = vld [vmem:[#allocation3 + $0x60] sm:$0xff]
    %v344 = vld [vmem:[#allocation3 + $0x68] sm:$0xff]
    %v345 = vld [vmem:[#allocation3 + $0x70] sm:$0xff]
    %v346 = vld [vmem:[#allocation3 + $0x78] sm:$0xff]
    %v347 = vld [vmem:[#allocation3 + $0x80] sm:$0xff]
    %v348 = vld [vmem:[#allocation3 + $0x88] sm:$0xff]
    %v349 = vld [vmem:[#allocation3 + $0x90] sm:$0xff]
    %v350 = vld [vmem:[#allocation3 + $0x98] sm:$0xff]
    %v351 = vld [vmem:[#allocation3 + $0xa0] sm:$0xff]
    %v352 = vld [vmem:[#allocation3 + $0xa8] sm:$0xff]
    %v353 = vld [vmem:[#allocation3 + $0xb0] sm:$0xff]
    %v354 = vld [vmem:[#allocation3 + $0xb8] sm:$0xff]
    %v355 = vld [vmem:[#allocation3 + $0xc0] sm:$0xff]
    %v356 = vld [vmem:[#allocation3 + $0xc8] sm:$0xff]
    %v357 = vld [vmem:[#allocation3 + $0xd0] sm:$0xff]
    %v358 = vld [vmem:[#allocation3 + $0xd8] sm:$0xff]
    %v359 = vld [vmem:[#allocation3 + $0xe0] sm:$0xff]
    %v360 = vld [vmem:[#allocation3 + $0xe8] sm:$0xff]
    %v361 = vld [vmem:[#allocation3 + $0xf0] sm:$0xff]
    %v362 = vld [vmem:[#allocation3 + $0xf8] sm:$0xff]
    %v363 = vld [vmem:[#allocation3 + $0x100] sm:$0xff]
    %v364 = vld [vmem:[#allocation3 + $0x108] sm:$0xff]
    %v365 = vld [vmem:[#allocation3 + $0x110] sm:$0xff]
    %v366 = vld [vmem:[#allocation3 + $0x118] sm:$0xff]
    %v367 = vld [vmem:[#allocation3 + $0x120] sm:$0xff]
    %v368 = vld [vmem:[#allocation3 + $0x128] sm:$0xff]
    %v369 = vld [vmem:[#allocation3 + $0x130] sm:$0xff]
    %v370 = vld [vmem:[#allocation3 + $0x138] sm:$0xff]
    %v371 = vld [vmem:[#allocation3 + $0x140] sm:$0xff]
    %v372 = vld [vmem:[#allocation3 + $0x148] sm:$0xff]
    %v373 = vld [vmem:[#allocation3 + $0x150] sm:$0xff]
    %v374 = vld [vmem:[#allocation3 + $0x158] sm:$0xff]
    %v375 = vld [vmem:[#allocation3 + $0x160] sm:$0xff]
    %v376 = vld [vmem:[#allocation3 + $0x168] sm:$0xff]
    %v377 = vld [vmem:[#allocation3 + $0x170] sm:$0xff]
    %v378 = vld [vmem:[#allocation3 + $0x178] sm:$0xff]
    %v379 = vld [vmem:[#allocation3 + $0x180] sm:$0xff]
    %v380 = vld [vmem:[#allocation3 + $0x188] sm:$0xff]
    %v381 = vld [vmem:[#allocation3 + $0x190] sm:$0xff]
    %v382 = vld [vmem:[#allocation3 + $0x198] sm:$0xff]
    %v383 = vld [vmem:[#allocation3 + $0x1a0] sm:$0xff]
    %v384 = vld [vmem:[#allocation3 + $0x1a8] sm:$0xff]
    %v385 = vld [vmem:[#allocation3 + $0x1b0] sm:$0xff]
    %v386 = vld [vmem:[#allocation3 + $0x1b8] sm:$0xff]
    %v387 = vld [vmem:[#allocation3 + $0x1c0] sm:$0xff]
    %v388 = vld [vmem:[#allocation3 + $0x1c8] sm:$0xff]
    %v389 = vld [vmem:[#allocation3 + $0x1d0] sm:$0xff]
    %v390 = vld [vmem:[#allocation3 + $0x1d8] sm:$0xff]
    %v391 = vld [vmem:[#allocation3 + $0x1e0] sm:$0xff]
    %v392 = vld [vmem:[#allocation3 + $0x1e8] sm:$0xff]
    %v393 = vld [vmem:[#allocation3 + $0x1f0] sm:$0xff]
    %v394 = vld [vmem:[#allocation3 + $0x1f8] sm:$0xff]
    %396 = vset.pattern.permute.xlu0 0
    %397 = vperm.xlu0 %396, %v330
    %v398 = vpop.permute.xlu0 %397
    %401 = vst [vmem:[#allocation1] ss:$4 sm:$0xff] %v327
    %v402 = vld.sshfl [vmem:[#allocation1] sm:$0xff pattern:$0x73625140]
    %v403 = vld.sshfl [vmem:[#allocation1 + $0x8] sm:$0xff pattern:$0x73625140]
    %406 = vmatpush.msra.mxu0 %v361
    %407 = vmatpush.msra.mxu0 %v359
    %408 = vmatpush.msra.mxu0 %v357
    %409 = vmatpush.msra.mxu0 %v355
    %410 = vmatpush.msra.mxu0 %v353
    %411 = vmatpush.msra.mxu0 %v351
    %412 = vmatpush.msra.mxu0 %v349
    %413 = vmatpush.msra.mxu0 %v347
    %414 = vmatpush.msra.mxu0 %v345
    %415 = vmatpush.msra.mxu0 %v343
    %416 = vmatpush.msra.mxu0 %v341
    %417 = vmatpush.msra.mxu0 %v339
    %418 = vmatpush.msra.mxu0 %v337
    %419 = vmatpush.msra.mxu0 %v335
    %420 = vmatpush.msra.mxu0 %v333
    %421 = vmatpush.msra.mxu0 %v331
    %422 = vmatmul.f32.gmra.mxu0 %v402
    %v423 = vpop.f32.mrf.mxu0
    %v424 = vadd.f32 %v398, %v423
    %425 = vdwg.mxu0
    %426 = vmatpush.msra.mxu0 %v393
    %427 = vmatpush.msra.mxu0 %v391
    %428 = vmatpush.msra.mxu0 %v389
    %429 = vmatpush.msra.mxu0 %v387
    %430 = vmatpush.msra.mxu0 %v385
    %431 = vmatpush.msra.mxu0 %v383
    %432 = vmatpush.msra.mxu0 %v381
    %433 = vmatpush.msra.mxu0 %v379
    %434 = vmatpush.msra.mxu0 %v377
    %435 = vmatpush.msra.mxu0 %v375
    %436 = vmatpush.msra.mxu0 %v373
    %437 = vmatpush.msra.mxu0 %v371
    %438 = vmatpush.msra.mxu0 %v369
    %439 = vmatpush.msra.mxu0 %v367
    %440 = vmatpush.msra.mxu0 %v365
    %441 = vmatpush.msra.mxu0 %v363
    %442 = vmatmul.f32.gmra.mxu0 %v403
    %v443 = vpop.f32.mrf.mxu0
    %v444 = vadd.f32 %v424, %v443
    %445 = vdwg.mxu0
    %446 = vmatpush.msra.mxu0 %v362
    %447 = vmatpush.msra.mxu0 %v360
    %448 = vmatpush.msra.mxu0 %v358
    %449 = vmatpush.msra.mxu0 %v356
    %450 = vmatpush.msra.mxu0 %v354
    %451 = vmatpush.msra.mxu0 %v352
    %452 = vmatpush.msra.mxu0 %v350
    %453 = vmatpush.msra.mxu0 %v348
    %454 = vmatpush.msra.mxu0 %v346
    %455 = vmatpush.msra.mxu0 %v344
    %456 = vmatpush.msra.mxu0 %v342
    %457 = vmatpush.msra.mxu0 %v340
    %458 = vmatpush.msra.mxu0 %v338
    %459 = vmatpush.msra.mxu0 %v336
    %460 = vmatpush.msra.mxu0 %v334
    %461 = vmatpush.msra.mxu0 %v332
    %462 = vmatmul.f32.gmra.mxu0 %v402
    %v463 = vpop.f32.mrf.mxu0
    %v464 = vadd.f32 %v398, %v463
    %465 = vdwg.mxu0
    %466 = vmatpush.msra.mxu0 %v394
    %467 = vmatpush.msra.mxu0 %v392
    %468 = vmatpush.msra.mxu0 %v390
    %469 = vmatpush.msra.mxu0 %v388
    %470 = vmatpush.msra.mxu0 %v386
    %471 = vmatpush.msra.mxu0 %v384
    %472 = vmatpush.msra.mxu0 %v382
    %473 = vmatpush.msra.mxu0 %v380
    %474 = vmatpush.msra.mxu0 %v378
    %475 = vmatpush.msra.mxu0 %v376
    %476 = vmatpush.msra.mxu0 %v374
    %477 = vmatpush.msra.mxu0 %v372
    %478 = vmatpush.msra.mxu0 %v370
    %479 = vmatpush.msra.mxu0 %v368
    %480 = vmatpush.msra.mxu0 %v366
    %481 = vmatpush.msra.mxu0 %v364
    %482 = vmatmul.f32.gmra.mxu0 %v403
    %v483 = vpop.f32.mrf.mxu0
    %v484 = vadd.f32 %v464, %v483
    %485 = vdwg.mxu0
    %486 = vst [vmem:[#allocation1] ss:$4 sm:$0xff] %v327
    %v487 = vld.sshfl [vmem:[#allocation1] sm:$0xff pattern:$0x73625140]
    %v488 = vld.sshfl [vmem:[#allocation1 + $0x8] sm:$0xff pattern:$0x73625140]
    %vm491 = vcmask 1041408
    %v492 = vsel %vm491, %v487, 0.0
    %v493 = vsel %vm491, %v488, 0.0
    %v494 = vadd.f32 %v492, %v493
    %495 = vadd.xlane.f32.xlu0 %v494
    %v496 = vpop.xlane.xlu0 %495
    %v497 = vadd.f32 %v330, %v496
    %vm498 = vcmask 1024
    %499 = vst.msk [vmem:[#allocation2] sm:$0x3] %vm498, %v497
    %v500 = vlaneseq
    %v501 = vand.u32 %v500, 127
    %v502 = vadd.s32 %v501, 128
    %s503 = smul.u32 0, 256
    %v504 = vstv %s503
    %v505 = vadd.s32 %v501, %v504
    %v506 = vadd.s32 %v502, %v504
    %v507 = vcvt.s32.f32 %v505
    %v508 = vcvt.s32.f32 %v506
    %510 = vset.pattern.permute.xlu0 0
    %511 = vperm.xlu0 %510, %v329
    %v512 = vpop.permute.xlu0 %511
    %v514 = vsub.f32 %v512, %v444
    %v515 = vsub.f32 %v512, %v484
    %v516 = vadd.f32 %v507, 1.0
    %v517 = vadd.f32 %v508, 1.0
    %v518 = vadd.f32 %v512, %v516
    %v519 = vadd.f32 %v512, %v517
    %v520 = vsub.f32 %v518, %v444
    %v521 = vsub.f32 %v519, %v484
    %522 = vst [vmem:[#allocation1] ss:$4 sm:$0xff] %v327
    %v523 = vld.sshfl [vmem:[#allocation1] sm:$0xff pattern:$0x73625140]
    %v524 = vld.sshfl [vmem:[#allocation1 + $0x8] sm:$0xff pattern:$0x73625140]
    %v527 = vsub.f32 %v444, %v523
    %v528 = vsub.f32 %v484, %v524
    %v529 = vsub.f32 %v512, %v527
    %v530 = vsub.f32 %v512, %v528
    %v531 = vadd.f32 %v512, %v507
    %v532 = vadd.f32 %v512, %v508
    %v533 = vsub.f32 %v531, %v527
    %v534 = vsub.f32 %v532, %v528
    %vm535 = vcmp.eq.s32.totalorder %v505, 0
    %vm536 = vcmp.eq.s32.totalorder %v506, 0
    %v537 = vsel %vm535, 1.0, %v533
    %v538 = vsel %vm536, 1.0, %v534
    %v539 = vsub.f32 %v520, %v514
    %v540 = vsub.f32 %v521, %v515
    %v541 = vmul.f32 %v529, %v520
    %v542 = vmul.f32 %v530, %v521
    %v543 = vmul.f32 %v514, %v537
    %v544 = vmul.f32 %v515, %v538
    %v545 = vsub.f32 %v541, %v543
    %v546 = vsub.f32 %v542, %v544
    %v547 = vsel %vm535, %v539, %v545
    %v548 = vsel %vm536, %v540, %v546
    %v549 = vmul.f32 %v520, %v537
    %v550 = vmul.f32 %v521, %v538
    %v551 = vrcp.pop %v549
    %v552 = vmul.f32 %v549, %v551
    %v553 = vsub.f32 1.0, %v552
    %v554 = vmul.f32 %v551, %v553
    %v555 = vadd.f32 %v551, %v554
    %vm556 = vweird.f32 %v549
    %vm557 = vweird.f32 %v551
    %vm558 = vmor %vm556, %vm557
    %v559 = vsel %vm558, %v551, %v555
    %v560 = vand.u32 2147483647, %v549
    %vm561 = vcmp.eq.f32.partialorder %v560, 8.507059e+37
    %v562 = vand.u32 %v549, 2147483648
    %v563 = vor.u32 1.1754944e-38, %v562
    %v564 = vsel %vm561, %v563, %v559
    %v565 = vmul.f32 %v547, %v564
    %v566 = vrcp.pop %v550
    %v567 = vmul.f32 %v550, %v566
    %v568 = vsub.f32 1.0, %v567
    %v569 = vmul.f32 %v566, %v568
    %v570 = vadd.f32 %v566, %v569
    %vm571 = vweird.f32 %v550
    %vm572 = vweird.f32 %v566
    %vm573 = vmor %vm571, %vm572
    %v574 = vsel %vm573, %v566, %v570
    %v575 = vand.u32 2147483647, %v550
    %vm576 = vcmp.eq.f32.partialorder %v575, 8.507059e+37
    %v577 = vand.u32 %v550, 2147483648
    %v578 = vor.u32 1.1754944e-38, %v577
    %v579 = vsel %vm576, %v578, %v574
    %v580 = vmul.f32 %v548, %v579
    %v581 = vld [vmem:[%s3] sm:$0x3]
    %v582 = vmax.f32 %v328, 0.0
    %v585 = vrot.slane %v580, 6
    %v586 = vsel %vm491, %v565, %v585
    %v588 = vmul.f32 %v582, %v586
    %590 = vst [vmem:[#allocation1] ss:$4 sm:$0xff] %v588
    %v591 = vld.sshfl [vmem:[#allocation1] sm:$0xff pattern:$0x73625140]
    %v592 = vld.sshfl [vmem:[#allocation1 + $0x8] sm:$0xff pattern:$0x73625140]
    %v595 = vsel %vm491, %v591, 0.0
    %v596 = vsel %vm491, %v592, 0.0
    %v597 = vadd.f32 %v595, %v596
    %598 = vadd.xlane.f32.xlu0 %v597
    %v599 = vpop.xlane.xlu0 %598
    %v600 = vadd.f32 %v581, %v599
    %601 = vst.msk [vmem:[%s3] sm:$0x3] %vm498, %v600
    // Predicated region
    $region22: #{tpu_custom_call.1} parent=1 // pred_check
      _
    $region23: #{tpu_custom_call.1} parent=1 // pred_check_branch
      %603 = sbr.rel (0) target = $region25
    $region24: #{tpu_custom_call.1} parent=1 // pred_region
      _
    $region25: #{tpu_custom_call.1} parent=1 // pred_fallthru
      _
    // Predicated region
    $region26: #{tpu_custom_call.1} parent=1 // pred_check
      _
    $region27: #{tpu_custom_call.1} parent=1 // pred_check_branch
      %605 = sbr.rel (0) target = $region29
    $region28: #{tpu_custom_call.1} parent=1 // pred_region
      _
    $region29: #{tpu_custom_call.1} parent=1 // pred_fallthru
      _
    %606 = vsyncpa [#allocation5], 1

</llo_original>
